<compile_context>
chip_gen: v6e
topology: v6e:2x2x1
jax: 0.10.0
libtpu: 0.0.40
codegen_flags: <defaults>
</compile_context>

<pallas_src>
import math

import jax
import jax.numpy as jnp
from jax.experimental import pallas as pl
from jax.experimental.pallas import tpu as pltpu


# ---------------------------------------------------------------------------
# Primary path: whole-tensor HBM -> HBM identity copy via concurrent DMAs.
# ---------------------------------------------------------------------------

_TARGET_DMA_CHUNK_BYTES = 32 * 1024 * 1024   # ~32 MiB per DMA descriptor
_MAX_DMA_CHUNKS = 8                          # keep a few DMAs in flight


def _hbm_copy_flat(flat):
    """Identity copy of a flat 1-D array as chunked HBM->HBM DMAs."""
    total = int(flat.shape[0])
    itemsize = jnp.dtype(flat.dtype).itemsize
    total_bytes = total * itemsize

    n_chunks = (total_bytes + _TARGET_DMA_CHUNK_BYTES - 1) // _TARGET_DMA_CHUNK_BYTES
    n_chunks = max(1, min(_MAX_DMA_CHUNKS, n_chunks))

    # Static (offset, size) chunk table computed at trace time.
    base, rem = divmod(total, n_chunks)
    chunks = []
    off = 0
    for c in range(n_chunks):
        size = base + (1 if c < rem else 0)
        if size > 0:
            chunks.append((off, size))
            off += size
    n = len(chunks)

    def kernel(x_hbm, o_hbm, sems):
        copies = []
        for idx, (coff, csize) in enumerate(chunks):
            cp = pltpu.make_async_copy(
                x_hbm.at[pl.ds(coff, csize)],
                o_hbm.at[pl.ds(coff, csize)],
                sems.at[idx],
            )
            cp.start()          # prime all DMAs ...
            copies.append(cp)
        for cp in copies:       # ... then wait for all of them
            cp.wait()

    return pl.pallas_call(
        kernel,
        out_shape=jax.ShapeDtypeStruct((total,), flat.dtype),
        in_specs=[pl.BlockSpec(memory_space=pl.ANY)],
        out_specs=pl.BlockSpec(memory_space=pl.ANY),
        scratch_shapes=[pltpu.SemaphoreType.DMA((n,))],
        cost_estimate=pl.CostEstimate(
            flops=0,
            transcendentals=0,
            bytes_accessed=2 * total_bytes,
        ),
    )(flat)


# ---------------------------------------------------------------------------
# Fallback path: lane-dense VMEM-pipelined tiled copy (proven-safe variant).
# Only used if the HBM->HBM DMA path fails to lower on a given backend.
# ---------------------------------------------------------------------------

_LANE_CANDIDATES = (4096, 2048, 1024, 512, 256, 128)
# ~2 MiB per block -> 4 resident double-buffered blocks (in+out) = ~8 MiB,
# safely inside default scoped VMEM on v5e/v6e/v7x.
_TARGET_BLOCK_BYTES = 2 * 1024 * 1024


def _copy_tile_kernel(x_ref, o_ref):
    # Identity copy of one lane-dense (tm, LANE) tile resident in VMEM.
    o_ref[...] = x_ref[...]


def _vmem_tiled_copy_2d(x2d):
    """Tiled, software-pipelined identity copy of a 2-D slab."""
    m, lane = int(x2d.shape[0]), int(x2d.shape[1])
    itemsize = jnp.dtype(x2d.dtype).itemsize
    # Packed-dtype minimum sublane tile: 8 (f32), 16 (bf16), 32 (int8/fp8).
    sub = max(8, (8 * 4) // itemsize)

    rows_budget = max(1, _TARGET_BLOCK_BYTES // (lane * itemsize))
    tm = max(sub, (rows_budget // sub) * sub)
    if tm >= m:
        tm = m  # full-extent block: exempt from (sub, 128) divisibility rule
    grid = (pl.cdiv(m, tm),)

    return pl.pallas_call(
        _copy_tile_kernel,
        out_shape=jax.ShapeDtypeStruct((m, lane), x2d.dtype),
        grid_spec=pltpu.PrefetchScalarGridSpec(
            num_scalar_prefetch=0,
            grid=grid,
            in_specs=[pl.BlockSpec((tm, lane), lambda i: (i, 0))],
            out_specs=pl.BlockSpec((tm, lane), lambda i: (i, 0)),
        ),
        compiler_params=pltpu.CompilerParams(
            # Independent row tiles -> shard across the 2 TCs on v7x.
            dimension_semantics=("parallel",),
        ),
        cost_estimate=pl.CostEstimate(
            flops=0,
            transcendentals=0,
            bytes_accessed=2 * m * lane * itemsize,
        ),
    )(x2d)


def _pick_slab(total, min_rows):
    """Pick a lane-dense 2-D slab (M, LANE) covering `total` flat elements.

    Only called with `total` a (nonzero) multiple of 128, so a valid lane
    width always exists.
    """
    for lane in _LANE_CANDIDATES:
        if total % lane == 0 and total // lane >= min_rows:
            return total // lane, lane
    for lane in _LANE_CANDIDATES:
        if total % lane == 0:
            return total // lane, lane
    return 1, total  # unreachable for 128-divisible totals


def _identity_copy_flat_vmem(flat):
    """Fallback: tiled VMEM-staged identity copy of a flat 1-D array."""
    total = int(flat.shape[0])
    itemsize = jnp.dtype(flat.dtype).itemsize
    sub = max(8, (8 * 4) // itemsize)

    # 128-divisible main slab + small (<128 elements) tail copied separately,
    # instead of forcing the whole tensor into one VMEM block.
    main = (total // 128) * 128
    pieces = []
    if main:
        m, lane = _pick_slab(main, sub)
        out2d = _vmem_tiled_copy_2d(jnp.reshape(flat[:main], (m, lane)))
        pieces.append(jnp.reshape(out2d, (main,)))
    tail = total - main
    if tail:
        out_t = _vmem_tiled_copy_2d(jnp.reshape(flat[main:], (1, tail)))
        pieces.append(jnp.reshape(out_t, (tail,)))
    return pieces[0] if len(pieces) == 1 else jnp.concatenate(pieces)


# ---------------------------------------------------------------------------
# Module-level forward.
# ---------------------------------------------------------------------------

def reshape_forward(x, shape):
    """Equivalent of PyTorch Reshape(*shape)(x) == x.view(x.size(0), *shape)."""
    b = x.shape[0]
    n = math.prod(x.shape[1:]) if len(x.shape) > 1 else 1

    # torch .view allows a single -1 to be inferred.
    shape = tuple(int(s) for s in shape)
    if shape.count(-1) > 1:
        raise ValueError("only one dimension can be inferred (-1)")
    if -1 in shape:
        known = math.prod(s for s in shape if s != -1)
        if known <= 0 or n % known != 0:
            raise ValueError(f"cannot view {x.shape} as {(b, *shape)}")
        shape = tuple(n // known if s == -1 else s for s in shape)
    if math.prod(shape) != n:
        raise ValueError(f"cannot view {x.shape} as {(b, *shape)}")

    out_shape = (b, *shape)
    total = b * n
    if total == 0:
        # Nothing to copy; pure metadata.
        return jnp.reshape(x, out_shape)

    # Fold batch into one flat row-major buffer (matches torch's contiguous
    # element order); metadata-only in XLA, no data movement.
    flat = jnp.reshape(x, (total,))
    try:
        out = _hbm_copy_flat(flat)
    except Exception:  # pragma: no cover — backend without HBM->HBM DMA support
        out = _identity_copy_flat_vmem(flat)
    # Final metadata-only reshape to (B, *shape).
    return jnp.reshape(out, out_shape)


class Reshape:
    """Thin wrapper mirroring the PyTorch module interface."""

    def __init__(self, *shape):
        self.shape = shape

    def __call__(self, x):
        return reshape_forward(x, self.shape)


if __name__ == "__main__":
    key = jax.random.PRNGKey(0)
    # Small NCHW-style input: batch=2, channels=4, spatial=16x16 -> N = 1024.
    x = jax.random.normal(key, (2, 4, 16, 16), dtype=jnp.float32)

    # Case 1: Reshape(8, 128): view (2, 4, 16, 16) as (2, 8, 128).
    y1 = jax.block_until_ready(Reshape(8, 128)(x))
    ref1 = jnp.reshape(x, (x.shape[0], 8, 128))
    assert y1.shape == (2, 8, 128)
    assert y1.dtype == x.dtype
    assert bool(jnp.all(y1 == ref1))

    # Case 2: Reshape(-1): inferred flatten, view as (2, 1024).
    y2 = jax.block_until_ready(Reshape(-1)(x))
    ref2 = jnp.reshape(x, (x.shape[0], -1))
    assert y2.shape == (2, 1024)
    assert bool(jnp.all(y2 == ref2))

    print("KERNEL_OK")
</pallas_src>

<mosaic_0001>
module attributes {stable_mosaic.version = 11 : i64} {
  func.func @_copy_tile_kernel(%arg0: i32, %arg1: memref<8x256xf32, #tpu.memory_space<vmem>>, %arg2: memref<8x256xf32, #tpu.memory_space<vmem>>) attributes {dimension_semantics = [#tpu.dimension_semantics<parallel>], iteration_bounds = array<i64: 1>, scalar_prefetch = 0 : i64, scratch_operands = 0 : i64, tpu.core_type = #tpu.core_type<tc>, window_params = [{transform_indices = @transform_0, window_bounds = array<i64: 8, 256>}, {transform_indices = @transform_1, window_bounds = array<i64: 8, 256>}]} {
    %c0 = arith.constant 0 : index
    %c0_0 = arith.constant 0 : index
    %0 = vector.load %arg1[%c0, %c0_0] : memref<8x256xf32, #tpu.memory_space<vmem>>, vector<8x256xf32>
    %c0_1 = arith.constant 0 : index
    %c0_2 = arith.constant 0 : index
    %1 = vector.load %arg2[%c0_1, %c0_2] : memref<8x256xf32, #tpu.memory_space<vmem>>, vector<8x256xf32>
    tpu.vector_store %arg2[%c0_1, %c0_2], %0 {strides = array<i32>} : memref<8x256xf32, #tpu.memory_space<vmem>>, vector<8x256xf32>,
    return
  }
  func.func @transform_0(%arg0: i32) -> (i32, i32) {
    %c0_i32 = arith.constant 0 : i32
    %c0_i32_0 = arith.constant 0 : i32
    return %arg0, %c0_i32 : i32, i32
  }
  func.func @transform_1(%arg0: i32) -> (i32, i32) {
    %c0_i32 = arith.constant 0 : i32
    %c0_i32_0 = arith.constant 0 : i32
    return %arg0, %c0_i32 : i32, i32
  }
}

</mosaic_0001>

<llo_original>
// kernel: tpu_custom_call.1
$region0: #{tpu_custom_call.1}
  #allocation0 [shape = 'u32[]', space=smem, size = 0x4, offset = 0x4, fixed_abs, tag = 'smem constant byte address 0x4 - core index']
  #allocation1 [shape = 'u32[144,128]{1,0:T(1,128)}', space=vmem, size = 0x12000, scoped, tag = 'internal scratch']
  %s0 = inlined_call_operand.hbm [shape: f32[8,256], index: 0, kind: input, shape index: {}]
  %s1 = inlined_call_operand.hbm [shape: f32[8,256], index: 1, kind: output, shape index: {}]
  %s2 = sld [smem:[#allocation0]]
  $region18: #{tpu_custom_call.1} parent=0
    _
  %s4 = ssub.s32 1, %s2
  %s5 = scalar_select 0, %s4, %s2
  $region1: #{tpu_custom_call.1} parent=0
    #allocation2 [shape = 'u8[8192]{0}', space=vmem, size = 0x2000, scoped, tag = 'input window, operand 0, single buffered']
    #allocation3 [shape = 's32[1]{0}', space=sflag, size = 0x4, scoped, tag = 'scoped memory for tpu_custom_call.1']
    #allocation4 [shape = 's32[1]{0}', space=sflag, size = 0x4, scoped, tag = 'scoped memory for tpu_custom_call.1']
    #allocation5 [shape = 'u8[8192]{0}', space=vmem, size = 0x2000, scoped, tag = 'output window, operand 0, single buffered']
    %6 = vsyncpa [#allocation3], 0
    %7 = vsyncpa [#allocation4], 0
    // Predicated region
    $region2: #{tpu_custom_call.1} parent=1 // pred_check
      _
    $region3: #{tpu_custom_call.1} parent=1 // pred_check_branch
      %9 = sbr.rel (0) target = $region5
    $region4: #{tpu_custom_call.1} parent=1 // pred_region
      %s11 = ssub.s32 256, 256
      %12 = vsyncadd [#allocation3], %s11
      %s14 = sshll.u32 [#allocation2], 4
      %s15 = int_to_ptr.vmem [resolvable:$true] %s14
      %17 = dma.hbm_to_vmem [thread:$0]  %s0, 256, %s15, [#allocation3]
    $region5: #{tpu_custom_call.1} parent=1 // pred_fallthru
      _
    // Predicated region
    $region6: #{tpu_custom_call.1} parent=1 // pred_check
      _
    $region7: #{tpu_custom_call.1} parent=1 // pred_check_branch
      %19 = sbr.rel (0) target = $region9
    $region8: #{tpu_custom_call.1} parent=1 // pred_region
      %20 = dma.done [#allocation3], 256
    $region9: #{tpu_custom_call.1} parent=1 // pred_fallthru
      _
    %v21 = vld [vmem:[#allocation2] sm:$0xff]
    %v22 = vld [vmem:[#allocation2 + $0x8] sm:$0xff]
    %23 = vst [vmem:[#allocation5] sm:$0xff] %v21
    %24 = vst [vmem:[#allocation5 + $0x8] sm:$0xff] %v22
    // Predicated region
    $region10: #{tpu_custom_call.1} parent=1 // pred_check
      _
    $region11: #{tpu_custom_call.1} parent=1 // pred_check_branch
      %26 = sbr.rel (0) target = $region13
    $region12: #{tpu_custom_call.1} parent=1 // pred_region
      %s28 = ssub.s32 256, 256
      %29 = vsyncadd [#allocation4], %s28
      %s31 = sshll.u32 [#allocation5], 4
      %s32 = int_to_ptr.vmem [resolvable:$true] %s31
      %34 = dma.vmem_to_hbm [thread:$0]  %s32, 256, %s1, [#allocation4]
    $region13: #{tpu_custom_call.1} parent=1 // pred_fallthru
      _
    // Predicated region
    $region14: #{tpu_custom_call.1} parent=1 // pred_check
      _
    $region15: #{tpu_custom_call.1} parent=1 // pred_check_branch
      %36 = sbr.rel (0) target = $region17
    $region16: #{tpu_custom_call.1} parent=1 // pred_region
      %37 = dma.done [#allocation4], 256
    $region17: #{tpu_custom_call.1} parent=1 // pred_fallthru
      _
    %38 = vsyncpa [#allocation3], 1
    %39 = vsyncpa [#allocation4], 1

</llo_original>
